<compile_context>
chip_gen: v7x
topology: tpu7x:2x2x1
jax: 0.10.0
libtpu: 0.0.40
codegen_flags: <defaults>
</compile_context>

<pallas_src>
import functools

import jax
import jax.numpy as jnp
from jax import lax
from jax.experimental import pallas as pl
from jax.experimental.pallas import tpu as pltpu

_NT_DIMS = (((1,), (1,)), ((), ()))   # contract last dim of both operands


def _critic_kernel(s_ref, a_ref, w1s_ref, w1a_ref, b1_ref, w2_ref, b2_ref,
                   w3_ref, b3_ref, out_ref):
    """Fused 3-layer MLP for one batch tile.

    s_ref:   (TB, S)   state tile          w1s_ref: (S, H)   bf16
    a_ref:   (TB, A)   action tile         w1a_ref: (A, H)   bf16
    b1_ref:  (1, H)    f32
    w2_ref:  (H, H1)   bf16                b2_ref:  (1, H1)  f32
    w3_ref:  (8, H1)   bf16 (row 0 = real last-layer weights, rows 1..7 zero)
    b3_ref:  (1, 1)    f32
    out_ref: (1, TB)   lane-dense value row for this tile
    """
    s = s_ref[...].astype(jnp.bfloat16)
    a = a_ref[...].astype(jnp.bfloat16)

    # layer 1: state @ W1s + action @ W1a + b1  (== cat([s, a]) @ W1 + b1)
    h1 = jnp.dot(s, w1s_ref[...], preferred_element_type=jnp.float32)
    h1 = h1 + jnp.dot(a, w1a_ref[...], preferred_element_type=jnp.float32)
    h1 = jnp.maximum(h1 + b1_ref[...], 0.0)                       # ReLU, f32

    # layer 2
    h2 = jnp.dot(h1.astype(jnp.bfloat16), w2_ref[...],
                 preferred_element_type=jnp.float32)
    h2 = jnp.maximum(h2 + b2_ref[...], 0.0)                       # ReLU, f32

    # layer 3 as w3_row @ h2^T: result is (8, TB) with the batch on the lane
    # axis, so the store below is an unmasked, lane-dense write.
    v = lax.dot_general(w3_ref[...], h2.astype(jnp.bfloat16), _NT_DIMS,
                        preferred_element_type=jnp.float32)       # (8, TB)
    out_ref[...] = (v[0:1, :] + b3_ref[...]).astype(out_ref.dtype)


def _round_up(x, m):
    return (x + m - 1) // m * m


@functools.partial(jax.jit, static_argnames=("batch_tile",))
def critic_forward(state, action, params, batch_tile=512):
    """Pallas-backed Critic.forward(state, action) -> (batch, 1) values."""
    w1s, w1a, b1, w2, b2, w3, b3 = params
    batch, s_dim = state.shape
    a_dim = action.shape[1]
    h, h1 = w1s.shape[1], w2.shape[1]

    # Batch tiling: one tile for small batches, otherwise batch_tile-row tiles
    # (batch_tile must be a multiple of 128 so the lane-dense output blocks
    # stay aligned). >=2 grid steps lets v7x shard them across TensorCores.
    if batch <= batch_tile:
        tb = max(8, _round_up(batch, 8))
        bp, num_tiles = tb, 1
    else:
        assert batch_tile % 128 == 0, "batch_tile must be a multiple of 128"
        tb = batch_tile
        bp = _round_up(batch, tb)
        num_tiles = bp // tb

    pad = bp - batch
    state_p = jnp.pad(state, ((0, pad), (0, 0))) if pad else state
    action_p = jnp.pad(action, ((0, pad), (0, 0))) if pad else action

    # Weights to bf16 for the MXU (f32 accumulation in-kernel); biases f32.
    # The tiny (1,)-wide last layer is padded to 8 sublanes so its tile is
    # (8, H1) and the NT matmul result lands lane-dense.
    w1s_b = w1s.astype(jnp.bfloat16)
    w1a_b = w1a.astype(jnp.bfloat16)
    w2_b = w2.astype(jnp.bfloat16)
    w3r = jnp.zeros((8, h1), jnp.bfloat16).at[0, :].set(
        w3[:, 0].astype(jnp.bfloat16))
    b1r = b1.reshape(1, h).astype(jnp.float32)
    b2r = b2.reshape(1, h1).astype(jnp.float32)
    b3r = b3.reshape(1, 1).astype(jnp.float32)

    out = pl.pallas_call(
        _critic_kernel,
        out_shape=jax.ShapeDtypeStruct((1, bp), jnp.float32),
        grid_spec=pltpu.PrefetchScalarGridSpec(
            num_scalar_prefetch=0,
            grid=(num_tiles,),
            in_specs=[
                # batch-tiled activations
                pl.BlockSpec((tb, s_dim), lambda i: (i, 0)),
                pl.BlockSpec((tb, a_dim), lambda i: (i, 0)),
                # weights / biases: full arrays, same block every grid step
                # (stay resident in VMEM across the batch tiles)
                pl.BlockSpec((s_dim, h), lambda i: (0, 0)),
                pl.BlockSpec((a_dim, h), lambda i: (0, 0)),
                pl.BlockSpec((1, h), lambda i: (0, 0)),
                pl.BlockSpec((h, h1), lambda i: (0, 0)),
                pl.BlockSpec((1, h1), lambda i: (0, 0)),
                pl.BlockSpec((8, h1), lambda i: (0, 0)),
                pl.BlockSpec((1, 1), lambda i: (0, 0)),
            ],
            # lane-dense output: one (1, tb) row block per grid step
            out_specs=pl.BlockSpec((1, tb), lambda i: (0, i)),
        ),
        compiler_params=pltpu.CompilerParams(
            dimension_semantics=("parallel",)),
    )(state_p, action_p, w1s_b, w1a_b, b1r, w2_b, b2r, w3r, b3r)

    return out[0, :batch].reshape(batch, 1)


def init_critic_params(key, state_size, action_size, hidden_layer=256,
                       hidden_layer1=256, w_init=0.003):
    """nn.Linear-style init mirroring the PyTorch module. The first layer's
    weight is stored already split into state/action halves, all weights as
    (in_features, out_features)."""
    ks = jax.random.split(key, 7)
    in0 = state_size + action_size

    def uni(k, shape, bound):
        return jax.random.uniform(k, shape, jnp.float32, -bound, bound)

    bnd0 = 1.0 / float(in0) ** 0.5
    bnd1 = 1.0 / float(hidden_layer) ** 0.5
    w1s = uni(ks[0], (state_size, hidden_layer), bnd0)
    w1a = uni(ks[1], (action_size, hidden_layer), bnd0)
    b1 = uni(ks[2], (hidden_layer,), bnd0)
    w2 = uni(ks[3], (hidden_layer, hidden_layer1), bnd1)
    b2 = uni(ks[4], (hidden_layer1,), bnd1)
    w3 = uni(ks[5], (hidden_layer1, 1), w_init)
    b3 = uni(ks[6], (1,), w_init)
    return (w1s, w1a, b1, w2, b2, w3, b3)


def critic_reference(state, action, params):
    """Pure-JAX f32 reference matching the PyTorch module semantics."""
    w1s, w1a, b1, w2, b2, w3, b3 = params
    h = jnp.maximum(state @ w1s + action @ w1a + b1, 0.0)
    h = jnp.maximum(h @ w2 + b2, 0.0)
    return h @ w3 + b3


if __name__ == "__main__":
    # Small shapes consistent with the module: state=16, action=8, hidden=32.
    state_size, action_size = 16, 8
    hidden_layer = hidden_layer1 = 32

    key = jax.random.PRNGKey(0)
    k_s, k_a, k_p, k_s2, k_a2 = jax.random.split(key, 5)
    params = init_critic_params(k_p, state_size, action_size,
                                hidden_layer, hidden_layer1)

    # Case 1: tiny batch (single tile).
    state = jax.random.normal(k_s, (2, state_size), jnp.float32)
    action = jax.random.normal(k_a, (2, action_size), jnp.float32)
    value = critic_forward(state, action, params)
    jax.block_until_ready(value)
    ref = critic_reference(state, action, params)
    assert value.shape == (2, 1), value.shape
    assert jnp.allclose(value, ref, atol=1e-2, rtol=1e-2), (value, ref)

    # Case 2: multi-tile batch (exercises the tiled "parallel" grid path).
    state2 = jax.random.normal(k_s2, (200, state_size), jnp.float32)
    action2 = jax.random.normal(k_a2, (200, action_size), jnp.float32)
    value2 = critic_forward(state2, action2, params, batch_tile=128)
    jax.block_until_ready(value2)
    ref2 = critic_reference(state2, action2, params)
    assert value2.shape == (200, 1), value2.shape
    assert jnp.allclose(value2, ref2, atol=1e-2, rtol=1e-2), (
        float(jnp.max(jnp.abs(value2 - ref2))))

    print("KERNEL_OK")
</pallas_src>

<mosaic_0001>
module attributes {stable_mosaic.version = 11 : i64} {
  func.func @_critic_kernel(%arg0: i32, %arg1: memref<8x16xf32, #tpu.memory_space<vmem>>, %arg2: memref<8x8xf32, #tpu.memory_space<vmem>>, %arg3: memref<16x32xbf16, #tpu.memory_space<vmem>>, %arg4: memref<8x32xbf16, #tpu.memory_space<vmem>>, %arg5: memref<1x32xf32, #tpu.memory_space<vmem>>, %arg6: memref<32x32xbf16, #tpu.memory_space<vmem>>, %arg7: memref<1x32xf32, #tpu.memory_space<vmem>>, %arg8: memref<8x32xbf16, #tpu.memory_space<vmem>>, %arg9: memref<1x1xf32, #tpu.memory_space<vmem>>, %arg10: memref<1x8xf32, #tpu.memory_space<vmem>>) attributes {dimension_semantics = [#tpu.dimension_semantics<parallel>], iteration_bounds = array<i64: 1>, scalar_prefetch = 0 : i64, scratch_operands = 0 : i64, tpu.core_type = #tpu.core_type<tc>, window_params = [{transform_indices = @transform_0, window_bounds = array<i64: 8, 16>}, {transform_indices = @transform_1, window_bounds = array<i64: 8, 8>}, {pipeline_mode = #tpu.pipeline_mode<synchronous>, transform_indices = @transform_2, window_bounds = array<i64: 16, 32>}, {pipeline_mode = #tpu.pipeline_mode<synchronous>, transform_indices = @transform_3, window_bounds = array<i64: 8, 32>}, {pipeline_mode = #tpu.pipeline_mode<synchronous>, transform_indices = @transform_4, window_bounds = array<i64: 1, 32>}, {pipeline_mode = #tpu.pipeline_mode<synchronous>, transform_indices = @transform_5, window_bounds = array<i64: 32, 32>}, {pipeline_mode = #tpu.pipeline_mode<synchronous>, transform_indices = @transform_6, window_bounds = array<i64: 1, 32>}, {pipeline_mode = #tpu.pipeline_mode<synchronous>, transform_indices = @transform_7, window_bounds = array<i64: 8, 32>}, {pipeline_mode = #tpu.pipeline_mode<synchronous>, transform_indices = @transform_8, window_bounds = array<i64: 1, 1>}, {transform_indices = @transform_9, window_bounds = array<i64: 1, 8>}]} {
    %c0 = arith.constant 0 : index
    %c0_0 = arith.constant 0 : index
    %0 = vector.load %arg1[%c0, %c0_0] : memref<8x16xf32, #tpu.memory_space<vmem>>, vector<8x16xf32>
    %1 = arith.truncf %0 : vector<8x16xf32> to vector<8x16xbf16>
    %c0_1 = arith.constant 0 : index
    %c0_2 = arith.constant 0 : index
    %2 = vector.load %arg2[%c0_1, %c0_2] : memref<8x8xf32, #tpu.memory_space<vmem>>, vector<8x8xf32>
    %3 = arith.truncf %2 : vector<8x8xf32> to vector<8x8xbf16>
    %c0_3 = arith.constant 0 : index
    %c0_4 = arith.constant 0 : index
    %4 = vector.load %arg3[%c0_3, %c0_4] : memref<16x32xbf16, #tpu.memory_space<vmem>>, vector<16x32xbf16>
    %cst = arith.constant dense<0.000000e+00> : vector<8x32xf32>
    %5 = tpu.matmul %1, %4, %cst {dimension_numbers = #tpu.dot_dimension_numbers<[1], [0], [0], [1], [0, 0, 1, 1], [], []>} : vector<8x16xbf16>, vector<16x32xbf16>, vector<8x32xf32> -> vector<8x32xf32>
    %c0_5 = arith.constant 0 : index
    %c0_6 = arith.constant 0 : index
    %6 = vector.load %arg4[%c0_5, %c0_6] : memref<8x32xbf16, #tpu.memory_space<vmem>>, vector<8x32xbf16>
    %cst_7 = arith.constant dense<0.000000e+00> : vector<8x32xf32>
    %7 = tpu.matmul %3, %6, %cst_7 {dimension_numbers = #tpu.dot_dimension_numbers<[1], [0], [0], [1], [0, 0, 1, 1], [], []>} : vector<8x8xbf16>, vector<8x32xbf16>, vector<8x32xf32> -> vector<8x32xf32>
    %8 = arith.addf %5, %7 : vector<8x32xf32>
    %c0_8 = arith.constant 0 : index
    %c0_9 = arith.constant 0 : index
    %9 = vector.load %arg5[%c0_8, %c0_9] : memref<1x32xf32, #tpu.memory_space<vmem>>, vector<1x32xf32>
    %10 = vector.broadcast %9 : vector<1x32xf32> to vector<8x32xf32>
    %11 = arith.addf %8, %10 : vector<8x32xf32>
    %cst_10 = arith.constant 0.000000e+00 : f32
    %12 = vector.broadcast %cst_10 : f32 to vector<8x32xf32>
    %13 = arith.maximumf %11, %12 : vector<8x32xf32>
    %14 = arith.truncf %13 : vector<8x32xf32> to vector<8x32xbf16>
    %c0_11 = arith.constant 0 : index
    %c0_12 = arith.constant 0 : index
    %15 = vector.load %arg6[%c0_11, %c0_12] : memref<32x32xbf16, #tpu.memory_space<vmem>>, vector<32x32xbf16>
    %cst_13 = arith.constant dense<0.000000e+00> : vector<8x32xf32>
    %16 = tpu.matmul %14, %15, %cst_13 {dimension_numbers = #tpu.dot_dimension_numbers<[1], [0], [0], [1], [0, 0, 1, 1], [], []>} : vector<8x32xbf16>, vector<32x32xbf16>, vector<8x32xf32> -> vector<8x32xf32>
    %c0_14 = arith.constant 0 : index
    %c0_15 = arith.constant 0 : index
    %17 = vector.load %arg7[%c0_14, %c0_15] : memref<1x32xf32, #tpu.memory_space<vmem>>, vector<1x32xf32>
    %18 = vector.broadcast %17 : vector<1x32xf32> to vector<8x32xf32>
    %19 = arith.addf %16, %18 : vector<8x32xf32>
    %cst_16 = arith.constant 0.000000e+00 : f32
    %20 = vector.broadcast %cst_16 : f32 to vector<8x32xf32>
    %21 = arith.maximumf %19, %20 : vector<8x32xf32>
    %c0_17 = arith.constant 0 : index
    %c0_18 = arith.constant 0 : index
    %22 = vector.load %arg8[%c0_17, %c0_18] : memref<8x32xbf16, #tpu.memory_space<vmem>>, vector<8x32xbf16>
    %23 = arith.truncf %21 : vector<8x32xf32> to vector<8x32xbf16>
    %cst_19 = arith.constant dense<0.000000e+00> : vector<8x8xf32>
    %24 = tpu.matmul %22, %23, %cst_19 {dimension_numbers = #tpu.dot_dimension_numbers<[1], [1], [0], [0], [0, 0, 1, 0], [], []>} : vector<8x32xbf16>, vector<8x32xbf16>, vector<8x8xf32> -> vector<8x8xf32>
    %25 = vector.extract_strided_slice %24 {offsets = [0, 0], sizes = [1, 8], strides = [1, 1]} : vector<8x8xf32> to vector<1x8xf32>
    %c0_20 = arith.constant 0 : index
    %c0_21 = arith.constant 0 : index
    %26 = vector.load %arg9[%c0_20, %c0_21] : memref<1x1xf32, #tpu.memory_space<vmem>>, vector<1x1xf32>
    %27 = vector.broadcast %26 : vector<1x1xf32> to vector<1x8xf32>
    %28 = arith.addf %25, %27 : vector<1x8xf32>
    %c0_22 = arith.constant 0 : index
    %c0_23 = arith.constant 0 : index
    %29 = vector.load %arg10[%c0_22, %c0_23] : memref<1x8xf32, #tpu.memory_space<vmem>>, vector<1x8xf32>
    tpu.vector_store %arg10[%c0_22, %c0_23], %28 {strides = array<i32>} : memref<1x8xf32, #tpu.memory_space<vmem>>, vector<1x8xf32>,
    return
  }
  func.func @transform_0(%arg0: i32) -> (i32, i32) {
    %c0_i32 = arith.constant 0 : i32
    %c0_i32_0 = arith.constant 0 : i32
    return %arg0, %c0_i32 : i32, i32
  }
  func.func @transform_1(%arg0: i32) -> (i32, i32) {
    %c0_i32 = arith.constant 0 : i32
    %c0_i32_0 = arith.constant 0 : i32
    return %arg0, %c0_i32 : i32, i32
  }
  func.func @transform_2(%arg0: i32) -> (i32, i32) {
    %c0_i32 = arith.constant 0 : i32
    %c0_i32_0 = arith.constant 0 : i32
    %c0_i32_1 = arith.constant 0 : i32
    return %c0_i32, %c0_i32_0 : i32, i32
  }
  func.func @transform_3(%arg0: i32) -> (i32, i32) {
    %c0_i32 = arith.constant 0 : i32
    %c0_i32_0 = arith.constant 0 : i32
    %c0_i32_1 = arith.constant 0 : i32
    return %c0_i32, %c0_i32_0 : i32, i32
  }
  func.func @transform_4(%arg0: i32) -> (i32, i32) {
    %c0_i32 = arith.constant 0 : i32
    %c0_i32_0 = arith.constant 0 : i32
    %c0_i32_1 = arith.constant 0 : i32
    return %c0_i32, %c0_i32_0 : i32, i32
  }
  func.func @transform_5(%arg0: i32) -> (i32, i32) {
    %c0_i32 = arith.constant 0 : i32
    %c0_i32_0 = arith.constant 0 : i32
    %c0_i32_1 = arith.constant 0 : i32
    return %c0_i32, %c0_i32_0 : i32, i32
  }
  func.func @transform_6(%arg0: i32) -> (i32, i32) {
    %c0_i32 = arith.constant 0 : i32
    %c0_i32_0 = arith.constant 0 : i32
    %c0_i32_1 = arith.constant 0 : i32
    return %c0_i32, %c0_i32_0 : i32, i32
  }
  func.func @transform_7(%arg0: i32) -> (i32, i32) {
    %c0_i32 = arith.constant 0 : i32
    %c0_i32_0 = arith.constant 0 : i32
    %c0_i32_1 = arith.constant 0 : i32
    return %c0_i32, %c0_i32_0 : i32, i32
  }
  func.func @transform_8(%arg0: i32) -> (i32, i32) {
    %c0_i32 = arith.constant 0 : i32
    %c0_i32_0 = arith.constant 0 : i32
    %c0_i32_1 = arith.constant 0 : i32
    return %c0_i32, %c0_i32_0 : i32, i32
  }
  func.func @transform_9(%arg0: i32) -> (i32, i32) {
    %c0_i32 = arith.constant 0 : i32
    %c0_i32_0 = arith.constant 0 : i32
    return %c0_i32, %arg0 : i32, i32
  }
}

</mosaic_0001>

<llo_original>
// kernel: critic_forward.1
$region0: #{critic_forward.1}
  #allocation0 [shape = 'u32[]', space=smem, size = 0x4, offset = 0x4, fixed_abs, tag = 'smem constant byte address 0x4 - core index']
  #allocation1 [shape = 'u32[144,128]{1,0:T(1,128)}', space=vmem, size = 0x12000, scoped, tag = 'internal scratch']
  #allocation2 [shape = 'f32[1,1]{1,0:T(1,128)S(1)}', space=vmem, size = 0x200, scoped, tag = 'scoped memory for critic_forward.1']
  %s0 = inlined_call_operand.vmem [shape: f32[8,16], index: 0, kind: input, shape index: {}]
  %s1 = inlined_call_operand.vmem [shape: f32[8,8], index: 1, kind: input, shape index: {}]
  %s2 = inlined_call_operand.vmem [shape: bf16[16,32], index: 2, kind: input, shape index: {}]
  %s3 = inlined_call_operand.vmem [shape: bf16[8,32], index: 3, kind: input, shape index: {}]
  %s4 = inlined_call_operand.vmem [shape: f32[1,32], index: 4, kind: input, shape index: {}]
  %s5 = inlined_call_operand.vmem [shape: bf16[32,32], index: 5, kind: input, shape index: {}]
  %s6 = inlined_call_operand.vmem [shape: f32[1,32], index: 6, kind: input, shape index: {}]
  %s7 = inlined_call_operand.vmem [shape: bf16[8,32], index: 7, kind: input, shape index: {}]
  %s8 = inlined_call_operand.<no memory space> [shape: f32[1,1], index: 8, kind: input, shape index: {}]
  %s9 = inlined_call_operand.vmem [shape: f32[1,8], index: 9, kind: output, shape index: {}]
  %s10 = sld [smem:[#allocation0]]
  $region46: #{critic_forward.1} parent=0
    _
  %s12 = ssub.s32 1, %s10
  %s13 = scalar_select 0, %s12, %s10
  %v14 = vstv %s8
  %15 = vst [vmem:[#allocation2] sm:$0x1] %v14
  // Predicated region
  $region2: #{critic_forward.1} parent=0 // pred_check
    _
  $region3: #{critic_forward.1} parent=0 // pred_check_branch
    %17 = sbr.rel (0) target = $region5
  $region4: #{critic_forward.1} parent=0 // pred_region
    _
  $region5: #{critic_forward.1} parent=0 // pred_fallthru
    _
  // Predicated region
  $region6: #{critic_forward.1} parent=0 // pred_check
    _
  $region7: #{critic_forward.1} parent=0 // pred_check_branch
    %19 = sbr.rel (0) target = $region9
  $region8: #{critic_forward.1} parent=0 // pred_region
    _
  $region9: #{critic_forward.1} parent=0 // pred_fallthru
    _
  // Predicated region
  $region10: #{critic_forward.1} parent=0 // pred_check
    _
  $region11: #{critic_forward.1} parent=0 // pred_check_branch
    %21 = sbr.rel (0) target = $region13
  $region12: #{critic_forward.1} parent=0 // pred_region
    _
  $region13: #{critic_forward.1} parent=0 // pred_fallthru
    _
  // Predicated region
  $region14: #{critic_forward.1} parent=0 // pred_check
    _
  $region15: #{critic_forward.1} parent=0 // pred_check_branch
    %23 = sbr.rel (0) target = $region17
  $region16: #{critic_forward.1} parent=0 // pred_region
    _
  $region17: #{critic_forward.1} parent=0 // pred_fallthru
    _
  // Predicated region
  $region18: #{critic_forward.1} parent=0 // pred_check
    _
  $region19: #{critic_forward.1} parent=0 // pred_check_branch
    %25 = sbr.rel (0) target = $region21
  $region20: #{critic_forward.1} parent=0 // pred_region
    _
  $region21: #{critic_forward.1} parent=0 // pred_fallthru
    _
  // Predicated region
  $region22: #{critic_forward.1} parent=0 // pred_check
    _
  $region23: #{critic_forward.1} parent=0 // pred_check_branch
    %27 = sbr.rel (0) target = $region25
  $region24: #{critic_forward.1} parent=0 // pred_region
    _
  $region25: #{critic_forward.1} parent=0 // pred_fallthru
    _
  // Predicated region
  $region26: #{critic_forward.1} parent=0 // pred_check
    _
  $region27: #{critic_forward.1} parent=0 // pred_check_branch
    %29 = sbr.rel (0) target = $region29
  $region28: #{critic_forward.1} parent=0 // pred_region
    _
  $region29: #{critic_forward.1} parent=0 // pred_fallthru
    _
  // Predicated region
  $region30: #{critic_forward.1} parent=0 // pred_check
    _
  $region31: #{critic_forward.1} parent=0 // pred_check_branch
    %31 = sbr.rel (0) target = $region33
  $region32: #{critic_forward.1} parent=0 // pred_region
    _
  $region33: #{critic_forward.1} parent=0 // pred_fallthru
    _
  // Predicated region
  $region34: #{critic_forward.1} parent=0 // pred_check
    _
  $region35: #{critic_forward.1} parent=0 // pred_check_branch
    %33 = sbr.rel (0) target = $region37
  $region36: #{critic_forward.1} parent=0 // pred_region
    _
  $region37: #{critic_forward.1} parent=0 // pred_fallthru
    _
  %v35 = vld [vmem:[%s0] sm:$0xff]
  %v36 = vpack.c.bf16 %v35, %v35
  %v37 = vld [vmem:[%s1] sm:$0xff]
  %v38 = vpack.c.bf16 %v37, %v37
  %v39 = vld [vmem:[%s2] sm:$0xf]
  %v40 = vld [vmem:[%s2 + $0x4] sm:$0xf]
  %v41 = vld [vmem:[%s3] sm:$0xf]
  %vm42 = vcmask 64512
  %v44 = vsel %vm42, %v38, 0
  %vm46 = vcmask 1043456
  %v48 = vsel %vm46, %v41, 0
  %50 = vmatprep.subr.bf16.mxu0 0
  %51 = vmatpush1.bf16.msra.mxu0 %v48
  %52 = vmatprep.subr.bf16.mxu0 0
  %53 = vmatpush1.bf16.msra.mxu0 0
  %54 = vmatprep.subr.bf16.mxu0 0
  %55 = vmatpush1.bf16.msra.mxu0 0
  %56 = vmatprep.subr.bf16.mxu0 0
  %57 = vmatpush1.bf16.msra.mxu0 0
  %58 = vmatprep.subr.bf16.mxu0 0
  %59 = vmatpush1.bf16.msra.mxu0 0
  %60 = vmatprep.subr.bf16.mxu0 0
  %61 = vmatpush1.bf16.msra.mxu0 0
  %62 = vmatprep.subr.bf16.mxu0 0
  %63 = vmatpush1.bf16.msra.mxu0 0
  %64 = vmatprep.subr.bf16.mxu0 0
  %65 = vmatpush1.bf16.msra.mxu0 0
  %66 = vmatprep.subr.bf16.mxu0 0
  %67 = vmatpush1.bf16.msra.mxu0 0
  %68 = vmatprep.subr.bf16.mxu0 0
  %69 = vmatpush1.bf16.msra.mxu0 0
  %70 = vmatprep.subr.bf16.mxu0 0
  %71 = vmatpush1.bf16.msra.mxu0 0
  %72 = vmatprep.subr.bf16.mxu0 0
  %73 = vmatpush1.bf16.msra.mxu0 0
  %74 = vmatprep.subr.bf16.mxu0 0
  %75 = vmatpush1.bf16.msra.mxu0 0
  %76 = vmatprep.subr.bf16.mxu0 0
  %77 = vmatpush1.bf16.msra.mxu0 0
  %78 = vmatprep.subr.bf16.mxu0 0
  %79 = vmatpush1.bf16.msra.mxu0 0
  %80 = vmatprep.subr.bf16.mxu0 0
  %81 = vmatpush1.bf16.msra.mxu0 0
  %82 = vmatprep.mubr.bf16.mxu0 0
  %83 = vmatmul.mubr.bf16.gmra.mrb[0].mxu0 %v44
  %v84 = vpop.f32.mrb[0].mxu0
  %v85 = vadd.f32 0.0, %v84
  %v86 = vpop.f32.mrb[0].mxu0
  %v87 = vpop.f32.mrb[0].mxu0
  %v88 = vpop.f32.mrb[0].mxu0
  %89 = vdwg.mxu0
  %v92 = vunpack.c.l.b16 %v39
  %v93 = vunpack.c.l.b16 %v40
  %v94 = vpack.c.b16 %v93, %v92
  %vm96 = vcmask 130048
  %v98 = vsel %vm96, %v36, 0
  %100 = vmatprep.subr.bf16.mxu0 0
  %101 = vmatpush1.bf16.msra.mxu0 %v94
  %102 = vmatprep.subr.bf16.mxu0 0
  %103 = vmatpush1.bf16.msra.mxu0 0
  %104 = vmatprep.subr.bf16.mxu0 0
  %105 = vmatpush1.bf16.msra.mxu0 0
  %106 = vmatprep.subr.bf16.mxu0 0
  %107 = vmatpush1.bf16.msra.mxu0 0
  %108 = vmatprep.subr.bf16.mxu0 0
  %109 = vmatpush1.bf16.msra.mxu0 0
  %110 = vmatprep.subr.bf16.mxu0 0
  %111 = vmatpush1.bf16.msra.mxu0 0
  %112 = vmatprep.subr.bf16.mxu0 0
  %113 = vmatpush1.bf16.msra.mxu0 0
  %114 = vmatprep.subr.bf16.mxu0 0
  %115 = vmatpush1.bf16.msra.mxu0 0
  %116 = vmatprep.subr.bf16.mxu0 0
  %117 = vmatpush1.bf16.msra.mxu0 0
  %118 = vmatprep.subr.bf16.mxu0 0
  %119 = vmatpush1.bf16.msra.mxu0 0
  %120 = vmatprep.subr.bf16.mxu0 0
  %121 = vmatpush1.bf16.msra.mxu0 0
  %122 = vmatprep.subr.bf16.mxu0 0
  %123 = vmatpush1.bf16.msra.mxu0 0
  %124 = vmatprep.subr.bf16.mxu0 0
  %125 = vmatpush1.bf16.msra.mxu0 0
  %126 = vmatprep.subr.bf16.mxu0 0
  %127 = vmatpush1.bf16.msra.mxu0 0
  %128 = vmatprep.subr.bf16.mxu0 0
  %129 = vmatpush1.bf16.msra.mxu0 0
  %130 = vmatprep.subr.bf16.mxu0 0
  %131 = vmatpush1.bf16.msra.mxu0 0
  %132 = vmatprep.mubr.bf16.mxu0 0
  %133 = vmatmul.mubr.bf16.gmra.mrb[0].mxu0 %v98
  %v134 = vpop.f32.mrb[0].mxu0
  %v135 = vadd.f32 %v85, %v134
  %v136 = vpop.f32.mrb[0].mxu0
  %v137 = vpop.f32.mrb[0].mxu0
  %v138 = vpop.f32.mrb[0].mxu0
  %139 = vdwg.mxu0
  %v140 = vld [vmem:[%s4] sm:$0x1]
  %v142 = vlaneseq
  %v143 = vshrl.u32 %v142, 7
  %v144 = vsub.s32 0, %v143
  %v145 = vrot.slane %v140, %v144
  %v147 = vadd.f32 %v135, %v145
  %v148 = vmax.f32 %v147, 0.0
  %v149 = vpack.c.bf16 %v148, %v148
  %v150 = vld [vmem:[%s5] sm:$0xf]
  %v151 = vld [vmem:[%s5 + $0x4] sm:$0xf]
  %v152 = vld [vmem:[%s5 + $0x8] sm:$0xf]
  %v153 = vld [vmem:[%s5 + $0xc] sm:$0xf]
  %v154 = vld [vmem:[%s6] sm:$0x1]
  %v156 = vlaneseq
  %v157 = vshrl.u32 %v156, 7
  %v158 = vsub.s32 0, %v157
  %v159 = vrot.slane %v154, %v158
  %v165 = vunpack.c.l.b16 %v150
  %v166 = vunpack.c.l.b16 %v151
  %v167 = vunpack.c.l.b16 %v152
  %v168 = vunpack.c.l.b16 %v153
  %v169 = vpack.c.b16 %v166, %v165
  %v170 = vpack.c.b16 %v168, %v167
  %vm173 = vcmask 261120
  %v175 = vsel %vm173, %v149, 0
  %177 = vmatprep.subr.bf16.mxu0 0
  %178 = vmatpush1.bf16.msra.mxu0 %v169
  %179 = vmatprep.subr.bf16.mxu0 0
  %180 = vmatpush1.bf16.msra.mxu0 %v170
  %181 = vmatprep.subr.bf16.mxu0 0
  %182 = vmatpush1.bf16.msra.mxu0 0
  %183 = vmatprep.subr.bf16.mxu0 0
  %184 = vmatpush1.bf16.msra.mxu0 0
  %185 = vmatprep.subr.bf16.mxu0 0
  %186 = vmatpush1.bf16.msra.mxu0 0
  %187 = vmatprep.subr.bf16.mxu0 0
  %188 = vmatpush1.bf16.msra.mxu0 0
  %189 = vmatprep.subr.bf16.mxu0 0
  %190 = vmatpush1.bf16.msra.mxu0 0
  %191 = vmatprep.subr.bf16.mxu0 0
  %192 = vmatpush1.bf16.msra.mxu0 0
  %193 = vmatprep.subr.bf16.mxu0 0
  %194 = vmatpush1.bf16.msra.mxu0 0
  %195 = vmatprep.subr.bf16.mxu0 0
  %196 = vmatpush1.bf16.msra.mxu0 0
  %197 = vmatprep.subr.bf16.mxu0 0
  %198 = vmatpush1.bf16.msra.mxu0 0
  %199 = vmatprep.subr.bf16.mxu0 0
  %200 = vmatpush1.bf16.msra.mxu0 0
  %201 = vmatprep.subr.bf16.mxu0 0
  %202 = vmatpush1.bf16.msra.mxu0 0
  %203 = vmatprep.subr.bf16.mxu0 0
  %204 = vmatpush1.bf16.msra.mxu0 0
  %205 = vmatprep.subr.bf16.mxu0 0
  %206 = vmatpush1.bf16.msra.mxu0 0
  %207 = vmatprep.subr.bf16.mxu0 0
  %208 = vmatpush1.bf16.msra.mxu0 0
  %209 = vmatprep.mubr.bf16.mxu0 0
  %210 = vmatmul.mubr.bf16.gmra.mrb[0].mxu0 %v175
  %v211 = vpop.f32.mrb[0].mxu0
  %v212 = vadd.f32 %v159, %v211
  %v213 = vpop.f32.mrb[0].mxu0
  %v214 = vpop.f32.mrb[0].mxu0
  %v215 = vpop.f32.mrb[0].mxu0
  %216 = vdwg.mxu0
  %v217 = vmax.f32 %v212, 0.0
  %v218 = vld [vmem:[%s7] sm:$0xf]
  %v219 = vpack.c.bf16 %v217, %v217
  %v221 = vsel %vm173, %v218, 0
  %v224 = vsel %vm173, %v219, 0
  %226 = vmatprep.subr.bf16.mxu0 0
  %227 = vmatpush1.bf16.xpose.msra.mxu0 %v224
  %228 = vmatprep.subr.bf16.mxu0 0
  %229 = vmatpush1.bf16.xpose.msra.mxu0 0
  %230 = vmatprep.subr.bf16.mxu0 0
  %231 = vmatpush1.bf16.xpose.msra.mxu0 0
  %232 = vmatprep.subr.bf16.mxu0 0
  %233 = vmatpush1.bf16.xpose.msra.mxu0 0
  %234 = vmatprep.subr.bf16.mxu0 0
  %235 = vmatpush1.bf16.xpose.msra.mxu0 0
  %236 = vmatprep.subr.bf16.mxu0 0
  %237 = vmatpush1.bf16.xpose.msra.mxu0 0
  %238 = vmatprep.subr.bf16.mxu0 0
  %239 = vmatpush1.bf16.xpose.msra.mxu0 0
  %240 = vmatprep.subr.bf16.mxu0 0
  %241 = vmatpush1.bf16.xpose.msra.mxu0 0
  %242 = vmatprep.subr.bf16.mxu0 0
  %243 = vmatpush1.bf16.xpose.msra.mxu0 0
  %244 = vmatprep.subr.bf16.mxu0 0
  %245 = vmatpush1.bf16.xpose.msra.mxu0 0
  %246 = vmatprep.subr.bf16.mxu0 0
  %247 = vmatpush1.bf16.xpose.msra.mxu0 0
  %248 = vmatprep.subr.bf16.mxu0 0
  %249 = vmatpush1.bf16.xpose.msra.mxu0 0
  %250 = vmatprep.subr.bf16.mxu0 0
  %251 = vmatpush1.bf16.xpose.msra.mxu0 0
  %252 = vmatprep.subr.bf16.mxu0 0
  %253 = vmatpush1.bf16.xpose.msra.mxu0 0
  %254 = vmatprep.subr.bf16.mxu0 0
  %255 = vmatpush1.bf16.xpose.msra.mxu0 0
  %256 = vmatprep.subr.bf16.mxu0 0
  %257 = vmatpush1.bf16.xpose.msra.mxu0 0
  %258 = vmatprep.mubr.bf16.mxu0 0
  %259 = vmatmul.mubr.bf16.gmra.mrb[0].mxu0 %v221
  %v260 = vpop.f32.mrb[0].mxu0
  %v261 = vadd.f32 0.0, %v260
  %v262 = vpop.f32.mrb[0].mxu0
  %v263 = vpop.f32.mrb[0].mxu0
  %v264 = vpop.f32.mrb[0].mxu0
  %265 = vdwg.mxu0
  %v266 = vld [vmem:[#allocation2] sm:$0x1]
  %268 = vset.pattern.permute.xlu0 0
  %269 = vperm.xlu0 %268, %v266
  %v270 = vpop.permute.xlu0 %269
  %v272 = vlaneseq
  %v273 = vshrl.u32 %v272, 7
  %v274 = vsub.s32 0, %v273
  %v275 = vrot.slane %v270, %v274
  %v276 = vadd.f32 %v261, %v275
  %vm277 = vcmask 57344
  %278 = vst.msk [vmem:[%s9] sm:$0x1] %vm277, %v276
  // Predicated region
  $region38: #{critic_forward.1} parent=0 // pred_check
    _
  $region39: #{critic_forward.1} parent=0 // pred_check_branch
    %280 = sbr.rel (0) target = $region41
  $region40: #{critic_forward.1} parent=0 // pred_region
    _
  $region41: #{critic_forward.1} parent=0 // pred_fallthru
    _
  // Predicated region
  $region42: #{critic_forward.1} parent=0 // pred_check
    _
  $region43: #{critic_forward.1} parent=0 // pred_check_branch
    %282 = sbr.rel (0) target = $region45
  $region44: #{critic_forward.1} parent=0 // pred_region
    _
  $region45: #{critic_forward.1} parent=0 // pred_fallthru
    _

</llo_original>
